<compile_context>
chip_gen: v7x
topology: tpu7x:2x2x1
jax: 0.10.0
libtpu: 0.0.40
codegen_flags: <defaults>
</compile_context>

<pallas_src>
import functools

import jax
import jax.numpy as jnp
from jax import lax
from jax.experimental import pallas as pl
from jax.experimental.pallas import tpu as pltpu

_LANE = 128
_SUBLANE = 8


def _round_up(v, m):
    return (v + m - 1) // m * m


def _mdn_kernel(x_ref, w_ref, b_ref, out_ref, *, M, D):
    """One batch tile: MXU matmul + bias, then softmax/identity/exp on lane
    sub-ranges of a single 128-lane-aligned column group."""
    x = x_ref[...]                               # (TB, dim_input)
    w = w_ref[...]                               # (dim_input, G)   resident
    b = b_ref[...]                               # (1, G)           resident

    p = jnp.dot(x, w, preferred_element_type=jnp.float32) + b     # (TB, G) f32

    col = lax.broadcasted_iota(jnp.int32, p.shape, 1)
    alpha_lane = col < M
    mu_lane = jnp.logical_and(col >= M, col < (D + 1) * M)
    # sigma lanes are (D+1)*M <= col < (2D+1)*M; padded lanes >= N are ignored
    # by the wrapper slice, so they need no special handling.

    # Numerically-stable softmax over the alpha lanes only.
    a_logits = jnp.where(alpha_lane, p, jnp.float32(-1e30))
    row_max = jnp.max(a_logits, axis=1, keepdims=True)            # (TB, 1)

    # Single fused exp over the whole vreg:
    #   alpha lanes -> exp(p - row_max)   (softmax numerator)
    #   other lanes -> exp(p)             (sigma value; mu/pad lanes discarded)
    e = jnp.exp(p - jnp.where(alpha_lane, row_max, 0.0))

    denom = jnp.sum(jnp.where(alpha_lane, e, 0.0), axis=1, keepdims=True)
    alpha = e / denom          # exact divide: matches torch softmax to f32 eps

    # Packed output: alpha | mu | sigma in the original Linear column order.
    out_ref[...] = jnp.where(alpha_lane, alpha, jnp.where(mu_lane, p, e))


def pack_mdn_params(weight_t, bias, *, num_components, dim_output,
                    matmul_dtype=jnp.float32):
    """Pad the Linear params once (per parameter update), keeping the original
    column order, to a single 128-lane-aligned group."""
    M, D = num_components, dim_output
    N = (2 * D + 1) * M
    dim_input = weight_t.shape[0]
    assert weight_t.shape == (dim_input, N)
    assert bias.shape == (N,)
    G = _round_up(N, _LANE)
    w_pad = jnp.pad(weight_t.astype(matmul_dtype), ((0, 0), (0, G - N)))
    b_pad = jnp.pad(bias.astype(jnp.float32), (0, G - N)).reshape(1, G)
    return w_pad, b_pad


def mdn_forward_packed(x, w_pad, b_pad, *, num_components, dim_output,
                       block_b=2048, matmul_dtype=jnp.float32):
    """Forward pass given pre-padded params.

    Args:
      x:      (B, dim_input) float32
      w_pad:  (dim_input, G) padded transposed Linear weight (G = roundup(N,128))
      b_pad:  (1, G) padded bias (float32)
    Returns:
      alpha (B, M), mu (B, M, dim_output), sigma (B, M, dim_output), all f32.
    """
    B, dim_input = x.shape
    M, D = num_components, dim_output
    N = (2 * D + 1) * M
    G = w_pad.shape[1]
    assert G % _LANE == 0 and G >= N

    x = x.astype(matmul_dtype)

    # Batch tile: big (amortize ~0.35us/step pipeline overhead on v5e/v6e) but
    # capped at ceil(B/2) so there are >=2 "parallel" grid steps for v7x's two
    # TensorCores whenever B > 8.  VMEM/tile (lane-padded x + packed out,
    # double-buffered) ~= TB * 2 KiB -> ~4 MiB at TB=2048.
    half_b = _round_up(-(-B // 2), _SUBLANE)
    TB = max(_SUBLANE, min(_round_up(block_b, _SUBLANE), half_b))
    grid = (pl.cdiv(B, TB),)   # ragged last tile handled by Pallas, no jnp.pad

    kernel = functools.partial(_mdn_kernel, M=M, D=D)

    packed = pl.pallas_call(
        kernel,
        out_shape=jax.ShapeDtypeStruct((B, G), jnp.float32),
        grid=grid,
        in_specs=[
            pl.BlockSpec((TB, dim_input), lambda i: (i, 0)),
            pl.BlockSpec((dim_input, G), lambda i: (0, 0)),   # resident weight
            pl.BlockSpec((1, G), lambda i: (0, 0)),           # resident bias
        ],
        out_specs=pl.BlockSpec((TB, G), lambda i: (i, 0)),
        compiler_params=pltpu.CompilerParams(
            dimension_semantics=("parallel",)),
    )(x, w_pad, b_pad)

    # Glue: slice the real columns out of the packed block and reshape.
    # (Downstream consumers that can take the packed (B, G) block directly can
    #  skip these three slice/reshape passes.)
    alpha = packed[:, :M]
    mu = packed[:, M:(D + 1) * M].reshape(B, M, D)
    sigma = packed[:, (D + 1) * M:N].reshape(B, M, D)
    return alpha, mu, sigma


def mdn_forward(x, weight_t, bias, *, num_components, dim_output,
                block_b=2048, matmul_dtype=jnp.float32):
    """Convenience wrapper: pad params and run the packed forward."""
    w_pad, b_pad = pack_mdn_params(
        weight_t, bias, num_components=num_components, dim_output=dim_output,
        matmul_dtype=matmul_dtype)
    return mdn_forward_packed(
        x, w_pad, b_pad, num_components=num_components, dim_output=dim_output,
        block_b=block_b, matmul_dtype=matmul_dtype)


def _reference_forward(x, weight_t, bias, *, num_components, dim_output):
    """Pure-JAX reference, mirrors the PyTorch forward exactly."""
    M, D = num_components, dim_output
    p = x @ weight_t + bias
    alpha = jax.nn.softmax(p[:, :M], axis=1)
    mu = p[:, M:(D + 1) * M].reshape(-1, M, D)
    sigma = jnp.exp(p[:, (D + 1) * M:]).reshape(-1, M, D)
    return alpha, mu, sigma


if __name__ == "__main__":
    # Small, deterministic setup consistent with the module's __init__.
    dim_input = 32
    dim_output = 2
    num_components = 5
    batch = 8
    out_features = (2 * dim_output + 1) * num_components  # 25

    key = jax.random.PRNGKey(0)
    kx, kw, kb = jax.random.split(key, 3)

    x = jax.random.normal(kx, (batch, dim_input), dtype=jnp.float32)
    # Deterministic "Linear" params (Kaiming-uniform-ish scale, synthetic).
    bound = 1.0 / (dim_input ** 0.5)
    weight_t = jax.random.uniform(
        kw, (dim_input, out_features), dtype=jnp.float32,
        minval=-bound, maxval=bound)
    bias = jax.random.uniform(
        kb, (out_features,), dtype=jnp.float32, minval=-bound, maxval=bound)

    # Pad params once (hoisted out of the per-call path), jit the forward.
    w_pad, b_pad = pack_mdn_params(
        weight_t, bias, num_components=num_components, dim_output=dim_output)
    fwd = jax.jit(functools.partial(
        mdn_forward_packed, num_components=num_components,
        dim_output=dim_output))

    alpha, mu, sigma = fwd(x, w_pad, b_pad)
    jax.block_until_ready((alpha, mu, sigma))

    # Cross-check against a pure-JAX reference of the PyTorch module.
    a_ref, m_ref, s_ref = _reference_forward(
        x, weight_t, bias,
        num_components=num_components, dim_output=dim_output)
    assert alpha.shape == (batch, num_components)
    assert mu.shape == (batch, num_components, dim_output)
    assert sigma.shape == (batch, num_components, dim_output)
    assert jnp.allclose(alpha, a_ref, atol=1e-5, rtol=1e-4)
    assert jnp.allclose(jnp.sum(alpha, axis=1), 1.0, atol=1e-5)
    assert jnp.allclose(mu, m_ref, atol=1e-5, rtol=1e-4)
    assert jnp.allclose(sigma, s_ref, atol=1e-5, rtol=1e-4)

    print("KERNEL_OK")
</pallas_src>

<mosaic_0001>
module attributes {stable_mosaic.version = 11 : i64} {
  func.func @_mdn_kernel(%arg0: i32, %arg1: memref<8x32xf32, #tpu.memory_space<vmem>>, %arg2: memref<32x128xf32, #tpu.memory_space<vmem>>, %arg3: memref<1x128xf32, #tpu.memory_space<vmem>>, %arg4: memref<8x128xf32, #tpu.memory_space<vmem>>) attributes {dimension_semantics = [#tpu.dimension_semantics<parallel>], iteration_bounds = array<i64: 1>, scalar_prefetch = 0 : i64, scratch_operands = 0 : i64, tpu.core_type = #tpu.core_type<tc>, window_params = [{transform_indices = @transform_0, window_bounds = array<i64: 8, 32>}, {pipeline_mode = #tpu.pipeline_mode<synchronous>, transform_indices = @transform_1, window_bounds = array<i64: 32, 128>}, {pipeline_mode = #tpu.pipeline_mode<synchronous>, transform_indices = @transform_2, window_bounds = array<i64: 1, 128>}, {transform_indices = @transform_3, window_bounds = array<i64: 8, 128>}]} {
    %c0 = arith.constant 0 : index
    %c0_0 = arith.constant 0 : index
    %0 = vector.load %arg1[%c0, %c0_0] : memref<8x32xf32, #tpu.memory_space<vmem>>, vector<8x32xf32>
    %c0_1 = arith.constant 0 : index
    %c0_2 = arith.constant 0 : index
    %1 = vector.load %arg2[%c0_1, %c0_2] : memref<32x128xf32, #tpu.memory_space<vmem>>, vector<32x128xf32>
    %c0_3 = arith.constant 0 : index
    %c0_4 = arith.constant 0 : index
    %2 = vector.load %arg3[%c0_3, %c0_4] : memref<1x128xf32, #tpu.memory_space<vmem>>, vector<1x128xf32>
    %cst = arith.constant dense<0.000000e+00> : vector<8x128xf32>
    %3 = tpu.matmul %0, %1, %cst {dimension_numbers = #tpu.dot_dimension_numbers<[1], [0], [0], [1], [0, 0, 1, 1], [], []>} : vector<8x32xf32>, vector<32x128xf32>, vector<8x128xf32> -> vector<8x128xf32>
    %4 = vector.broadcast %2 : vector<1x128xf32> to vector<8x128xf32>
    %5 = arith.addf %3, %4 : vector<8x128xf32>
    %6 = tpu.iota {dimensions = array<i32: 1>} : vector<8x128xi32>
    %c5_i32 = arith.constant 5 : i32
    %7 = vector.broadcast %c5_i32 : i32 to vector<8x128xi32>
    %8 = arith.cmpi slt, %6, %7 : vector<8x128xi32>
    %c5_i32_5 = arith.constant 5 : i32
    %9 = vector.broadcast %c5_i32_5 : i32 to vector<8x128xi32>
    %10 = arith.cmpi sge, %6, %9 : vector<8x128xi32>
    %c15_i32 = arith.constant 15 : i32
    %11 = vector.broadcast %c15_i32 : i32 to vector<8x128xi32>
    %12 = arith.cmpi slt, %6, %11 : vector<8x128xi32>
    %13 = arith.andi %10, %12 : vector<8x128xi1>
    %cst_6 = arith.constant -1.000000e+30 : f32
    %14 = vector.broadcast %cst_6 : f32 to vector<8x128xf32>
    %15 = arith.select %8, %5, %14 : vector<8x128xi1>, vector<8x128xf32>
    %cst_7 = arith.constant dense<0xFF800000> : vector<8xf32>
    %16 = vector.multi_reduction <maximumf>, %15, %cst_7 [1] : vector<8x128xf32> to vector<8xf32>
    %17 = vector.shape_cast %16 : vector<8xf32> to vector<8x1xf32>
    %cst_8 = arith.constant 0.000000e+00 : f32
    %18 = vector.shape_cast %17 : vector<8x1xf32> to vector<8x1xf32>
    %19 = vector.broadcast %18 : vector<8x1xf32> to vector<8x128xf32>
    %20 = vector.broadcast %cst_8 : f32 to vector<8x128xf32>
    %21 = arith.select %8, %19, %20 : vector<8x128xi1>, vector<8x128xf32>
    %22 = arith.subf %5, %21 : vector<8x128xf32>
    %23 = math.exp %22 : vector<8x128xf32>
    %cst_9 = arith.constant 0.000000e+00 : f32
    %24 = vector.broadcast %cst_9 : f32 to vector<8x128xf32>
    %25 = arith.select %8, %23, %24 : vector<8x128xi1>, vector<8x128xf32>
    %cst_10 = arith.constant dense<0.000000e+00> : vector<8xf32>
    %26 = vector.multi_reduction <add>, %25, %cst_10 [1] : vector<8x128xf32> to vector<8xf32>
    %27 = vector.shape_cast %26 : vector<8xf32> to vector<8x1xf32>
    %28 = vector.broadcast %27 : vector<8x1xf32> to vector<8x128xf32>
    %29 = arith.divf %23, %28 : vector<8x128xf32>
    %30 = arith.select %13, %5, %23 : vector<8x128xi1>, vector<8x128xf32>
    %31 = arith.select %8, %29, %30 : vector<8x128xi1>, vector<8x128xf32>
    %c0_11 = arith.constant 0 : index
    %c0_12 = arith.constant 0 : index
    %32 = vector.load %arg4[%c0_11, %c0_12] : memref<8x128xf32, #tpu.memory_space<vmem>>, vector<8x128xf32>
    tpu.vector_store %arg4[%c0_11, %c0_12], %31 {strides = array<i32>} : memref<8x128xf32, #tpu.memory_space<vmem>>, vector<8x128xf32>,
    return
  }
  func.func @transform_0(%arg0: i32) -> (i32, i32) {
    %c0_i32 = arith.constant 0 : i32
    %c0_i32_0 = arith.constant 0 : i32
    return %arg0, %c0_i32 : i32, i32
  }
  func.func @transform_1(%arg0: i32) -> (i32, i32) {
    %c0_i32 = arith.constant 0 : i32
    %c0_i32_0 = arith.constant 0 : i32
    %c0_i32_1 = arith.constant 0 : i32
    return %c0_i32, %c0_i32_0 : i32, i32
  }
  func.func @transform_2(%arg0: i32) -> (i32, i32) {
    %c0_i32 = arith.constant 0 : i32
    %c0_i32_0 = arith.constant 0 : i32
    %c0_i32_1 = arith.constant 0 : i32
    return %c0_i32, %c0_i32_0 : i32, i32
  }
  func.func @transform_3(%arg0: i32) -> (i32, i32) {
    %c0_i32 = arith.constant 0 : i32
    %c0_i32_0 = arith.constant 0 : i32
    return %arg0, %c0_i32 : i32, i32
  }
}

</mosaic_0001>

<llo_original>
// kernel: mdn_forward_packed.1
$region0: #{mdn_forward_packed.1}
  #allocation0 [shape = 'u32[]', space=smem, size = 0x4, offset = 0x4, fixed_abs, tag = 'smem constant byte address 0x4 - core index']
  #allocation1 [shape = 'u32[144,128]{1,0:T(1,128)}', space=vmem, size = 0x12000, scoped, tag = 'internal scratch']
  %s0 = inlined_call_operand.hbm [shape: f32[8,32], index: 0, kind: input, shape index: {}]
  %s1 = inlined_call_operand.hbm [shape: f32[32,128], index: 1, kind: input, shape index: {}]
  %s2 = inlined_call_operand.vmem [shape: f32[1,128], index: 2, kind: input, shape index: {}]
  %s3 = inlined_call_operand.vmem [shape: f32[8,128], index: 3, kind: output, shape index: {}]
  %s4 = sld [smem:[#allocation0]]
  $region30: #{mdn_forward_packed.1} parent=0
    _
  %s6 = ssub.s32 1, %s4
  %s7 = scalar_select 0, %s6, %s4
  $region1: #{mdn_forward_packed.1} parent=0
    #allocation2 [shape = 'u8[4096]{0}', space=vmem, size = 0x1000, scoped, tag = 'input window, operand 0, single buffered']
    #allocation3 [shape = 's32[1]{0}', space=sflag, size = 0x4, scoped, tag = 'scoped memory for mdn_forward_packed.1']
    #allocation4 [shape = 'u8[16384]{0}', space=vmem, size = 0x4000, scoped, tag = 'input window, operand 1, single buffered']
    #allocation5 [shape = 's32[1]{0}', space=sflag, size = 0x4, scoped, tag = 'scoped memory for mdn_forward_packed.1']
    %8 = vsyncpa [#allocation3], 0
    %9 = vsyncpa [#allocation5], 0
    // Predicated region
    $region2: #{mdn_forward_packed.1} parent=1 // pred_check
      _
    $region3: #{mdn_forward_packed.1} parent=1 // pred_check_branch
      %11 = sbr.rel (0) target = $region5
    $region4: #{mdn_forward_packed.1} parent=1 // pred_region
      %s13 = ssub.s32 128, 128
      %14 = vsyncadd [#allocation3], %s13
      %s16 = sshll.u32 [#allocation2], 4
      %s17 = int_to_ptr.vmem [resolvable:$true] %s16
      %19 = dma.hbm_to_vmem [thread:$0]  %s0, 128, %s17, [#allocation3]
    $region5: #{mdn_forward_packed.1} parent=1 // pred_fallthru
      _
    // Predicated region
    $region6: #{mdn_forward_packed.1} parent=1 // pred_check
      _
    $region7: #{mdn_forward_packed.1} parent=1 // pred_check_branch
      %21 = sbr.rel (0) target = $region9
    $region8: #{mdn_forward_packed.1} parent=1 // pred_region
      %s23 = ssub.s32 512, 512
      %24 = vsyncadd [#allocation5], %s23
      %s25 = sshll.u32 [#allocation4], 4
      %s26 = int_to_ptr.vmem [resolvable:$true] %s25
      %31 = dma.hbm_to_vmem [thread:$0]  %s1, 512, %s26, [#allocation5], 128, 128, 8
    $region9: #{mdn_forward_packed.1} parent=1 // pred_fallthru
      _
    // Predicated region
    $region10: #{mdn_forward_packed.1} parent=1 // pred_check
      _
    $region11: #{mdn_forward_packed.1} parent=1 // pred_check_branch
      %33 = sbr.rel (0) target = $region13
    $region12: #{mdn_forward_packed.1} parent=1 // pred_region
      _
    $region13: #{mdn_forward_packed.1} parent=1 // pred_fallthru
      _
    // Predicated region
    $region14: #{mdn_forward_packed.1} parent=1 // pred_check
      _
    $region15: #{mdn_forward_packed.1} parent=1 // pred_check_branch
      %35 = sbr.rel (0) target = $region17
    $region16: #{mdn_forward_packed.1} parent=1 // pred_region
      %36 = dma.done [#allocation3], 128
    $region17: #{mdn_forward_packed.1} parent=1 // pred_fallthru
      _
    // Predicated region
    $region18: #{mdn_forward_packed.1} parent=1 // pred_check
      _
    $region19: #{mdn_forward_packed.1} parent=1 // pred_check_branch
      %38 = sbr.rel (0) target = $region21
    $region20: #{mdn_forward_packed.1} parent=1 // pred_region
      %39 = dma.done [#allocation5], 512
    $region21: #{mdn_forward_packed.1} parent=1 // pred_fallthru
      _
    %v40 = vld [vmem:[#allocation2] sm:$0xff]
    %v41 = vld [vmem:[#allocation4] sm:$0xff]
    %v42 = vld [vmem:[#allocation4 + $0x8] sm:$0xff]
    %v43 = vld [vmem:[#allocation4 + $0x10] sm:$0xff]
    %v44 = vld [vmem:[#allocation4 + $0x18] sm:$0xff]
    %v45 = vld [vmem:[%s2] sm:$0x1]
    %v47 = vlaneseq
    %v48 = vshrl.u32 %v47, 7
    %v49 = vsub.s32 0, %v48
    %v50 = vrot.slane %v45, %v49
    %vm52 = vcmask 261120
    %v54 = vsel %vm52, %v40, 0
    %56 = vmatprep.subr.mxu0 0.0
    %57 = vmatpush1.msra.mxu0 %v41
    %58 = vmatprep.subr.mxu0 0.0
    %59 = vmatpush1.msra.mxu0 %v42
    %60 = vmatprep.subr.mxu0 0.0
    %61 = vmatpush1.msra.mxu0 %v43
    %62 = vmatprep.subr.mxu0 0.0
    %63 = vmatpush1.msra.mxu0 %v44
    %64 = vmatprep.subr.mxu0 0.0
    %65 = vmatpush1.msra.mxu0 0.0
    %66 = vmatprep.subr.mxu0 0.0
    %67 = vmatpush1.msra.mxu0 0.0
    %68 = vmatprep.subr.mxu0 0.0
    %69 = vmatpush1.msra.mxu0 0.0
    %70 = vmatprep.subr.mxu0 0.0
    %71 = vmatpush1.msra.mxu0 0.0
    %72 = vmatprep.subr.mxu0 0.0
    %73 = vmatpush1.msra.mxu0 0.0
    %74 = vmatprep.subr.mxu0 0.0
    %75 = vmatpush1.msra.mxu0 0.0
    %76 = vmatprep.subr.mxu0 0.0
    %77 = vmatpush1.msra.mxu0 0.0
    %78 = vmatprep.subr.mxu0 0.0
    %79 = vmatpush1.msra.mxu0 0.0
    %80 = vmatprep.subr.mxu0 0.0
    %81 = vmatpush1.msra.mxu0 0.0
    %82 = vmatprep.subr.mxu0 0.0
    %83 = vmatpush1.msra.mxu0 0.0
    %84 = vmatprep.subr.mxu0 0.0
    %85 = vmatpush1.msra.mxu0 0.0
    %86 = vmatprep.subr.mxu0 0.0
    %87 = vmatpush1.msra.mxu0 0.0
    %88 = vmatprep.subr.mxu0 0.0
    %89 = vmatpush1.msra.mxu0 0.0
    %90 = vmatprep.subr.mxu0 0.0
    %91 = vmatpush1.msra.mxu0 0.0
    %92 = vmatprep.subr.mxu0 0.0
    %93 = vmatpush1.msra.mxu0 0.0
    %94 = vmatprep.subr.mxu0 0.0
    %95 = vmatpush1.msra.mxu0 0.0
    %96 = vmatprep.subr.mxu0 0.0
    %97 = vmatpush1.msra.mxu0 0.0
    %98 = vmatprep.subr.mxu0 0.0
    %99 = vmatpush1.msra.mxu0 0.0
    %100 = vmatprep.subr.mxu0 0.0
    %101 = vmatpush1.msra.mxu0 0.0
    %102 = vmatprep.subr.mxu0 0.0
    %103 = vmatpush1.msra.mxu0 0.0
    %104 = vmatprep.subr.mxu0 0.0
    %105 = vmatpush1.msra.mxu0 0.0
    %106 = vmatprep.subr.mxu0 0.0
    %107 = vmatpush1.msra.mxu0 0.0
    %108 = vmatprep.subr.mxu0 0.0
    %109 = vmatpush1.msra.mxu0 0.0
    %110 = vmatprep.subr.mxu0 0.0
    %111 = vmatpush1.msra.mxu0 0.0
    %112 = vmatprep.subr.mxu0 0.0
    %113 = vmatpush1.msra.mxu0 0.0
    %114 = vmatprep.subr.mxu0 0.0
    %115 = vmatpush1.msra.mxu0 0.0
    %116 = vmatprep.subr.mxu0 0.0
    %117 = vmatpush1.msra.mxu0 0.0
    %118 = vmatprep.subr.mxu0 0.0
    %119 = vmatpush1.msra.mxu0 0.0
    %120 = vmatprep.mubr.f32.mxu0 0.0
    %121 = vmatmul.mubr.f32.gmra.mrb[0].mxu0 %v54
    %v122 = vpop.f32.mrb[0].mxu0
    %v123 = vadd.f32 %v50, %v122
    %v124 = vpop.f32.mrb[0].mxu0
    %125 = vdwg.mxu0
    %v126 = vlaneseq
    %v127 = vand.u32 %v126, 127
    %vm128 = vcmp.lt.s32.totalorder %v127, 5
    %vm129 = vcmp.ge.s32.totalorder %v127, 5
    %vm130 = vcmp.lt.s32.totalorder %v127, 15
    %vm131 = vmand %vm129, %vm130
    %v132 = vsel %vm128, %v123, -1e+30
    %133 = vmax.xlane.f32.xlu0 %v132
    %v134 = vpop.xlane.xlu0 %133
    %v135 = vsel %vm128, %v134, 0.0
    %v136 = vsub.f32 %v123, %v135
    %v137 = vmul.f32 %v136, 1.442695
    %v138 = vpow.pop %v137
    %v139 = vsel %vm128, %v138, 0.0
    %140 = vadd.xlane.f32.xlu0 %v139
    %v141 = vpop.xlane.xlu0 %140
    %v142 = vrcp.pop %v141
    %v143 = vmul.f32 %v138, %v142
    %v144 = vsel %vm131, %v123, %v138
    %v145 = vsel %vm128, %v143, %v144
    %146 = vst [vmem:[%s3] sm:$0xff] %v145
    // Predicated region
    $region22: #{mdn_forward_packed.1} parent=1 // pred_check
      _
    $region23: #{mdn_forward_packed.1} parent=1 // pred_check_branch
      %148 = sbr.rel (0) target = $region25
    $region24: #{mdn_forward_packed.1} parent=1 // pred_region
      _
    $region25: #{mdn_forward_packed.1} parent=1 // pred_fallthru
      _
    // Predicated region
    $region26: #{mdn_forward_packed.1} parent=1 // pred_check
      _
    $region27: #{mdn_forward_packed.1} parent=1 // pred_check_branch
      %150 = sbr.rel (0) target = $region29
    $region28: #{mdn_forward_packed.1} parent=1 // pred_region
      _
    $region29: #{mdn_forward_packed.1} parent=1 // pred_fallthru
      _
    %151 = vsyncpa [#allocation3], 1
    %152 = vsyncpa [#allocation5], 1

</llo_original>
